<compile_context>
chip_gen: v7x
topology: tpu7x:2x2x1
jax: 0.10.0
libtpu: 0.0.40
codegen_flags: <defaults>
</compile_context>

<pallas_src>
import jax
import jax.numpy as jnp
from jax.experimental import pallas as pl
from jax.experimental.pallas import tpu as pltpu


def _gcn_fused_kernel(adj_ref, x_ref, w1t_ref, b1_ref, w2t_ref, b2_ref, o_ref):
    """Whole problem resident in VMEM (small N): both adjacency hops in one kernel."""
    ax = jnp.dot(adj_ref[...], x_ref[...],
                 preferred_element_type=jnp.float32)                      # [N, F]
    h = jnp.dot(ax.astype(w1t_ref.dtype), w1t_ref[...],
                preferred_element_type=jnp.float32)                       # [N, H]
    h = jnp.maximum(h + b1_ref[...], 0.0)
    # TODO(synk): training-mode dropout (random mask + 1/(1-p) scaling) not implemented;
    #             eval-mode dropout is the identity, matching module.eval().
    z = jnp.dot(h.astype(w2t_ref.dtype), w2t_ref[...],
                preferred_element_type=jnp.float32)                       # [N, Cp]
    out = jnp.dot(adj_ref[...], z.astype(adj_ref.dtype),
                  preferred_element_type=jnp.float32)                     # [N, Cp]
    o_ref[...] = (out + b2_ref[...]).astype(o_ref.dtype)


def _gcn_pass1_kernel(adj_ref, x_ref, w1t_ref, b1_ref, w2t_ref, z_ref, acc_ref):
    """K-tiled hop 1 + MLP epilogue: z_rows = relu((A_rows @ X) @ W1^T + b1) @ W2^T."""
    k = pl.program_id(1)

    @pl.when(k == 0)
    def _():
        acc_ref[...] = jnp.zeros_like(acc_ref)

    acc_ref[...] += jnp.dot(adj_ref[...], x_ref[...],
                            preferred_element_type=jnp.float32)           # [T, F]

    @pl.when(k == pl.num_programs(1) - 1)
    def _():
        h = jnp.dot(acc_ref[...].astype(w1t_ref.dtype), w1t_ref[...],
                    preferred_element_type=jnp.float32)                   # [T, H]
        h = jnp.maximum(h + b1_ref[...], 0.0)                             # bias + ReLU in f32
        z = jnp.dot(h.astype(w2t_ref.dtype), w2t_ref[...],
                    preferred_element_type=jnp.float32)                   # [T, Cp]
        z_ref[...] = z.astype(z_ref.dtype)                                # bf16, lane-dense


def _gcn_pass2_kernel(adj_ref, z_ref, b2_ref, o_ref, acc_ref):
    """K-tiled hop 2: out_rows = A_rows @ z + b2 (padded class dim, lane-dense store)."""
    k = pl.program_id(1)

    @pl.when(k == 0)
    def _():
        acc_ref[...] = jnp.zeros_like(acc_ref)

    acc_ref[...] += jnp.dot(adj_ref[...], z_ref[...],
                            preferred_element_type=jnp.float32)           # [T, Cp]

    @pl.when(k == pl.num_programs(1) - 1)
    def _():
        o_ref[...] = (acc_ref[...] + b2_ref[...]).astype(o_ref.dtype)


def gcn_forward(adj, x, w1, b1, w2, b2, *, tile_n=256, tile_k=512, fuse_max_n=1024):
    """adj:[N,N]  x:[N,F]  w1:[H,F]  b1:[H]  w2:[C,H]  b2:[C]  ->  [N,C] float32."""
    n, f = x.shape
    h_dim = w1.shape[0]
    c = w2.shape[0]
    assert w2.shape[1] == h_dim and w1.shape[1] == f
    cp = ((c + 127) // 128) * 128                 # class dim padded to full lane tiles

    # Wrapper-side dtype/layout prep: bf16 operands for the MXU, pre-transposed weights,
    # class dimension zero-padded to cp for lane-dense MXU output panels / stores.
    adj_bf = adj.astype(jnp.bfloat16)
    x_bf = x.astype(jnp.bfloat16)
    w1t = w1.T.astype(jnp.bfloat16)                               # [F, H]
    b1_2d = b1.reshape(1, -1).astype(jnp.float32)                 # [1, H]
    w2t_p = jnp.zeros((h_dim, cp), jnp.bfloat16).at[:, :c].set(w2.T.astype(jnp.bfloat16))
    b2_p = jnp.zeros((1, cp), jnp.float32).at[:, :c].set(b2.reshape(1, -1).astype(jnp.float32))

    vmem_limit = 48 * 1024 * 1024  # explicit scoped-VMEM cap; safe on v5e/v6e/v7x

    if n <= fuse_max_n:
        # Fused single-call path: A (and z) stay resident in VMEM; one launch, one A read.
        full = lambda arr: pl.BlockSpec(arr.shape, lambda i: (0, 0))
        out_p = pl.pallas_call(
            _gcn_fused_kernel,
            out_shape=jax.ShapeDtypeStruct((n, cp), jnp.float32),
            grid=(1,),
            in_specs=[full(adj_bf), full(x_bf), full(w1t), full(b1_2d),
                      full(w2t_p), full(b2_p)],
            out_specs=pl.BlockSpec((n, cp), lambda i: (0, 0)),
            compiler_params=pltpu.CompilerParams(vmem_limit_bytes=vmem_limit),
        )(adj_bf, x_bf, w1t, b1_2d, w2t_p, b2_p)
        return out_p[:, :c]

    # Tiled two-pass path: K-tiled reduction over A's columns keeps VMEM O(tile_n*tile_k).
    tile_n = min(tile_n, n)
    tile_k = min(tile_k, n)
    assert n % tile_n == 0, "N must be divisible by tile_n"
    assert n % tile_k == 0, "N must be divisible by tile_k"
    assert tile_n % 8 == 0, "tile_n must be 8-aligned (sublane)"
    assert tile_k % 128 == 0 or tile_k == n, "tile_k must be a multiple of 128 (lane)"

    grid = (n // tile_n, n // tile_k)
    cparams = pltpu.CompilerParams(
        dimension_semantics=("parallel", "arbitrary"),   # row tiles shard across v7x TCs
        vmem_limit_bytes=vmem_limit)

    # Pass 1: z = relu((A @ X) @ W1^T + b1) @ W2^T   (bf16, padded to cp lanes)
    z = pl.pallas_call(
        _gcn_pass1_kernel,
        out_shape=jax.ShapeDtypeStruct((n, cp), jnp.bfloat16),
        grid=grid,
        in_specs=[
            pl.BlockSpec((tile_n, tile_k), lambda i, k: (i, k)),   # A row/col slab
            pl.BlockSpec((tile_k, f), lambda i, k: (k, 0)),        # X k-slab
            pl.BlockSpec((f, h_dim), lambda i, k: (0, 0)),         # W1^T (resident)
            pl.BlockSpec((1, h_dim), lambda i, k: (0, 0)),         # b1
            pl.BlockSpec((h_dim, cp), lambda i, k: (0, 0)),        # W2^T padded
        ],
        out_specs=pl.BlockSpec((tile_n, cp), lambda i, k: (i, 0)),
        scratch_shapes=[pltpu.VMEM((tile_n, f), jnp.float32)],
        compiler_params=cparams,
    )(adj_bf, x_bf, w1t, b1_2d, w2t_p)

    # Pass 2: out = A @ z + b2   (second hop needs all rows of z -> separate call)
    out_p = pl.pallas_call(
        _gcn_pass2_kernel,
        out_shape=jax.ShapeDtypeStruct((n, cp), jnp.float32),
        grid=grid,
        in_specs=[
            pl.BlockSpec((tile_n, tile_k), lambda i, k: (i, k)),   # A row/col slab
            pl.BlockSpec((tile_k, cp), lambda i, k: (k, 0)),       # z k-slab (bf16)
            pl.BlockSpec((1, cp), lambda i, k: (0, 0)),            # b2 padded
        ],
        out_specs=pl.BlockSpec((tile_n, cp), lambda i, k: (i, 0)),
        scratch_shapes=[pltpu.VMEM((tile_n, cp), jnp.float32)],
        compiler_params=cparams,
    )(adj_bf, z, b2_p)
    return out_p[:, :c]


def _reference(adj, x, w1, b1, w2, b2):
    h = (adj @ x) @ w1.T + b1
    h = jnp.maximum(h, 0.0)
    return (adj @ h) @ w2.T + b2


if __name__ == "__main__":
    # Deterministic small problem: N nodes, F features, H hidden units, C classes.
    N, F, H, C = 256, 128, 128, 16

    key = jax.random.PRNGKey(0)
    k_adj, k_x, k_w1, k_b1, k_w2, k_b2 = jax.random.split(key, 6)

    # Symmetric, row-normalized adjacency (dense stand-in for the sparse adj).
    a_raw = (jax.random.uniform(k_adj, (N, N)) > 0.7).astype(jnp.float32)
    a_raw = jnp.maximum(a_raw, a_raw.T) + jnp.eye(N, dtype=jnp.float32)
    adj = a_raw / jnp.sum(a_raw, axis=1, keepdims=True)

    x = jax.random.normal(k_x, (N, F), dtype=jnp.float32)

    # nn.Linear-style init (uniform +/- 1/sqrt(fan_in)), deterministic.
    w1 = jax.random.uniform(k_w1, (H, F), minval=-1.0, maxval=1.0) / jnp.sqrt(F)
    b1 = jax.random.uniform(k_b1, (H,), minval=-1.0, maxval=1.0) / jnp.sqrt(F)
    w2 = jax.random.uniform(k_w2, (C, H), minval=-1.0, maxval=1.0) / jnp.sqrt(H)
    b2 = jax.random.uniform(k_b2, (C,), minval=-1.0, maxval=1.0) / jnp.sqrt(H)

    ref = _reference(adj, x, w1, b1, w2, b2)

    # Path 1: fused single-call kernel (default for small N).
    out_fused = jax.block_until_ready(gcn_forward(adj, x, w1, b1, w2, b2))
    assert out_fused.shape == (N, C)
    assert jnp.allclose(out_fused, ref, atol=2e-2, rtol=2e-2), "fused path mismatch vs reference"

    # Path 2: force the scalable K-tiled two-pass path to exercise its accumulation logic.
    out_tiled = jax.block_until_ready(
        gcn_forward(adj, x, w1, b1, w2, b2, tile_n=128, tile_k=128, fuse_max_n=0))
    assert out_tiled.shape == (N, C)
    assert jnp.allclose(out_tiled, ref, atol=2e-2, rtol=2e-2), "tiled path mismatch vs reference"

    print("KERNEL_OK")
</pallas_src>

<mosaic_0001>
module attributes {stable_mosaic.version = 11 : i64} {
  func.func @_gcn_fused_kernel(%arg0: i32, %arg1: memref<256x256xbf16, #tpu.memory_space<vmem>>, %arg2: memref<256x128xbf16, #tpu.memory_space<vmem>>, %arg3: memref<128x128xbf16, #tpu.memory_space<vmem>>, %arg4: memref<1x128xf32, #tpu.memory_space<vmem>>, %arg5: memref<128x128xbf16, #tpu.memory_space<vmem>>, %arg6: memref<1x128xf32, #tpu.memory_space<vmem>>, %arg7: memref<256x128xf32, #tpu.memory_space<vmem>>) attributes {dimension_semantics = [#tpu.dimension_semantics<arbitrary>], iteration_bounds = array<i64: 1>, scalar_prefetch = 0 : i64, scratch_operands = 0 : i64, tpu.core_type = #tpu.core_type<tc>, window_params = [{pipeline_mode = #tpu.pipeline_mode<synchronous>, transform_indices = @transform_0, window_bounds = array<i64: 256, 256>}, {pipeline_mode = #tpu.pipeline_mode<synchronous>, transform_indices = @transform_1, window_bounds = array<i64: 256, 128>}, {pipeline_mode = #tpu.pipeline_mode<synchronous>, transform_indices = @transform_2, window_bounds = array<i64: 128, 128>}, {pipeline_mode = #tpu.pipeline_mode<synchronous>, transform_indices = @transform_3, window_bounds = array<i64: 1, 128>}, {pipeline_mode = #tpu.pipeline_mode<synchronous>, transform_indices = @transform_4, window_bounds = array<i64: 128, 128>}, {pipeline_mode = #tpu.pipeline_mode<synchronous>, transform_indices = @transform_5, window_bounds = array<i64: 1, 128>}, {pipeline_mode = #tpu.pipeline_mode<synchronous>, transform_indices = @transform_6, window_bounds = array<i64: 256, 128>}]} {
    %c0 = arith.constant 0 : index
    %c0_0 = arith.constant 0 : index
    %0 = vector.load %arg1[%c0, %c0_0] : memref<256x256xbf16, #tpu.memory_space<vmem>>, vector<256x256xbf16>
    %c0_1 = arith.constant 0 : index
    %c0_2 = arith.constant 0 : index
    %1 = vector.load %arg2[%c0_1, %c0_2] : memref<256x128xbf16, #tpu.memory_space<vmem>>, vector<256x128xbf16>
    %cst = arith.constant dense<0.000000e+00> : vector<256x128xf32>
    %2 = tpu.matmul %0, %1, %cst {dimension_numbers = #tpu.dot_dimension_numbers<[1], [0], [0], [1], [0, 0, 1, 1], [], []>} : vector<256x256xbf16>, vector<256x128xbf16>, vector<256x128xf32> -> vector<256x128xf32>
    %3 = arith.truncf %2 : vector<256x128xf32> to vector<256x128xbf16>
    %c0_3 = arith.constant 0 : index
    %c0_4 = arith.constant 0 : index
    %4 = vector.load %arg3[%c0_3, %c0_4] : memref<128x128xbf16, #tpu.memory_space<vmem>>, vector<128x128xbf16>
    %cst_5 = arith.constant dense<0.000000e+00> : vector<256x128xf32>
    %5 = tpu.matmul %3, %4, %cst_5 {dimension_numbers = #tpu.dot_dimension_numbers<[1], [0], [0], [1], [0, 0, 1, 1], [], []>} : vector<256x128xbf16>, vector<128x128xbf16>, vector<256x128xf32> -> vector<256x128xf32>
    %c0_6 = arith.constant 0 : index
    %c0_7 = arith.constant 0 : index
    %6 = vector.load %arg4[%c0_6, %c0_7] : memref<1x128xf32, #tpu.memory_space<vmem>>, vector<1x128xf32>
    %7 = vector.broadcast %6 : vector<1x128xf32> to vector<256x128xf32>
    %8 = arith.addf %5, %7 : vector<256x128xf32>
    %cst_8 = arith.constant 0.000000e+00 : f32
    %9 = vector.broadcast %cst_8 : f32 to vector<256x128xf32>
    %10 = arith.maximumf %8, %9 : vector<256x128xf32>
    %11 = arith.truncf %10 : vector<256x128xf32> to vector<256x128xbf16>
    %c0_9 = arith.constant 0 : index
    %c0_10 = arith.constant 0 : index
    %12 = vector.load %arg5[%c0_9, %c0_10] : memref<128x128xbf16, #tpu.memory_space<vmem>>, vector<128x128xbf16>
    %cst_11 = arith.constant dense<0.000000e+00> : vector<256x128xf32>
    %13 = tpu.matmul %11, %12, %cst_11 {dimension_numbers = #tpu.dot_dimension_numbers<[1], [0], [0], [1], [0, 0, 1, 1], [], []>} : vector<256x128xbf16>, vector<128x128xbf16>, vector<256x128xf32> -> vector<256x128xf32>
    %c0_12 = arith.constant 0 : index
    %c0_13 = arith.constant 0 : index
    %14 = vector.load %arg1[%c0_12, %c0_13] : memref<256x256xbf16, #tpu.memory_space<vmem>>, vector<256x256xbf16>
    %15 = arith.truncf %13 : vector<256x128xf32> to vector<256x128xbf16>
    %cst_14 = arith.constant dense<0.000000e+00> : vector<256x128xf32>
    %16 = tpu.matmul %14, %15, %cst_14 {dimension_numbers = #tpu.dot_dimension_numbers<[1], [0], [0], [1], [0, 0, 1, 1], [], []>} : vector<256x256xbf16>, vector<256x128xbf16>, vector<256x128xf32> -> vector<256x128xf32>
    %c0_15 = arith.constant 0 : index
    %c0_16 = arith.constant 0 : index
    %17 = vector.load %arg6[%c0_15, %c0_16] : memref<1x128xf32, #tpu.memory_space<vmem>>, vector<1x128xf32>
    %18 = vector.broadcast %17 : vector<1x128xf32> to vector<256x128xf32>
    %19 = arith.addf %16, %18 : vector<256x128xf32>
    %c0_17 = arith.constant 0 : index
    %c0_18 = arith.constant 0 : index
    %20 = vector.load %arg7[%c0_17, %c0_18] : memref<256x128xf32, #tpu.memory_space<vmem>>, vector<256x128xf32>
    tpu.vector_store %arg7[%c0_17, %c0_18], %19 {strides = array<i32>} : memref<256x128xf32, #tpu.memory_space<vmem>>, vector<256x128xf32>,
    return
  }
  func.func @transform_0(%arg0: i32) -> (i32, i32) {
    %c0_i32 = arith.constant 0 : i32
    %c0_i32_0 = arith.constant 0 : i32
    %c0_i32_1 = arith.constant 0 : i32
    return %c0_i32, %c0_i32_0 : i32, i32
  }
  func.func @transform_1(%arg0: i32) -> (i32, i32) {
    %c0_i32 = arith.constant 0 : i32
    %c0_i32_0 = arith.constant 0 : i32
    %c0_i32_1 = arith.constant 0 : i32
    return %c0_i32, %c0_i32_0 : i32, i32
  }
  func.func @transform_2(%arg0: i32) -> (i32, i32) {
    %c0_i32 = arith.constant 0 : i32
    %c0_i32_0 = arith.constant 0 : i32
    %c0_i32_1 = arith.constant 0 : i32
    return %c0_i32, %c0_i32_0 : i32, i32
  }
  func.func @transform_3(%arg0: i32) -> (i32, i32) {
    %c0_i32 = arith.constant 0 : i32
    %c0_i32_0 = arith.constant 0 : i32
    %c0_i32_1 = arith.constant 0 : i32
    return %c0_i32, %c0_i32_0 : i32, i32
  }
  func.func @transform_4(%arg0: i32) -> (i32, i32) {
    %c0_i32 = arith.constant 0 : i32
    %c0_i32_0 = arith.constant 0 : i32
    %c0_i32_1 = arith.constant 0 : i32
    return %c0_i32, %c0_i32_0 : i32, i32
  }
  func.func @transform_5(%arg0: i32) -> (i32, i32) {
    %c0_i32 = arith.constant 0 : i32
    %c0_i32_0 = arith.constant 0 : i32
    %c0_i32_1 = arith.constant 0 : i32
    return %c0_i32, %c0_i32_0 : i32, i32
  }
  func.func @transform_6(%arg0: i32) -> (i32, i32) {
    %c0_i32 = arith.constant 0 : i32
    %c0_i32_0 = arith.constant 0 : i32
    %c0_i32_1 = arith.constant 0 : i32
    return %c0_i32, %c0_i32_0 : i32, i32
  }
}

</mosaic_0001>

<llo_original>
// kernel: tpu_custom_call.1
$region0: #{tpu_custom_call.1}
  #allocation0 [shape = 'u32[]', space=smem, size = 0x4, offset = 0x4, fixed_abs, tag = 'smem constant byte address 0x4 - core index']
  #allocation1 [shape = 'u32[144,128]{1,0:T(1,128)}', space=vmem, size = 0x12000, scoped, tag = 'internal scratch']
  %s0 = inlined_call_operand.hbm [shape: bf16[256,256], index: 0, kind: input, shape index: {}]
  %s1 = inlined_call_operand.hbm [shape: bf16[256,128], index: 1, kind: input, shape index: {}]
  %s2 = inlined_call_operand.hbm [shape: bf16[128,128], index: 2, kind: input, shape index: {}]
  %s3 = inlined_call_operand.vmem [shape: f32[1,128], index: 3, kind: input, shape index: {}]
  %s4 = inlined_call_operand.hbm [shape: bf16[128,128], index: 4, kind: input, shape index: {}]
  %s5 = inlined_call_operand.vmem [shape: f32[1,128], index: 5, kind: input, shape index: {}]
  %s6 = inlined_call_operand.hbm [shape: f32[256,128], index: 6, kind: output, shape index: {}]
  %s7 = sld [smem:[#allocation0]]
  $region50: #{tpu_custom_call.1} parent=0
    _
  %s9 = ssub.s32 1, %s7
  %s10 = scalar_select 0, %s9, %s7
  $region1: #{tpu_custom_call.1} parent=0
    #allocation2 [shape = 'u8[131072]{0}', space=vmem, size = 0x20000, scoped, tag = 'input window, operand 0, single buffered']
    #allocation3 [shape = 's32[1]{0}', space=sflag, size = 0x4, scoped, tag = 'scoped memory for tpu_custom_call.1']
    #allocation4 [shape = 's32[1]{0}', space=sflag, size = 0x4, scoped, tag = 'scoped memory for tpu_custom_call.1']
    #allocation5 [shape = 'u8[65536]{0}', space=vmem, size = 0x10000, scoped, tag = 'input window, operand 1, single buffered']
    #allocation6 [shape = 's32[1]{0}', space=sflag, size = 0x4, scoped, tag = 'scoped memory for tpu_custom_call.1']
    #allocation7 [shape = 'u8[32768]{0}', space=vmem, size = 0x8000, scoped, tag = 'input window, operand 2, single buffered']
    #allocation8 [shape = 'u8[32768]{0}', space=vmem, size = 0x8000, scoped, tag = 'input window, operand 4, single buffered']
    #allocation9 [shape = 's32[1]{0}', space=sflag, size = 0x4, scoped, tag = 'scoped memory for tpu_custom_call.1']
    #allocation10 [shape = 'u8[131072]{0}', space=vmem, size = 0x20000, scoped, tag = 'output window, operand 0, single buffered']
    %11 = vsyncpa [#allocation3], 0
    %12 = vsyncpa [#allocation6], 0
    %13 = vsyncpa [#allocation9], 0
    %14 = vsyncpa [#allocation4], 0
    // Predicated region
    $region2: #{tpu_custom_call.1} parent=1 // pred_check
      _
    $region3: #{tpu_custom_call.1} parent=1 // pred_check_branch
      %16 = sbr.rel (0) target = $region5
    $region4: #{tpu_custom_call.1} parent=1 // pred_region
      %s18 = ssub.s32 4096, 4096
      %19 = vsyncadd [#allocation3], %s18
      %s20 = sshll.u32 [#allocation2], 4
      %s21 = int_to_ptr.vmem [resolvable:$true] %s20
      %26 = dma.hbm_to_vmem [thread:$0]  %s0, 4096, %s21, [#allocation3], 128, 128, 8
    $region5: #{tpu_custom_call.1} parent=1 // pred_fallthru
      _
    // Predicated region
    $region6: #{tpu_custom_call.1} parent=1 // pred_check
      _
    $region7: #{tpu_custom_call.1} parent=1 // pred_check_branch
      %28 = sbr.rel (0) target = $region9
    $region8: #{tpu_custom_call.1} parent=1 // pred_region
      %s30 = ssub.s32 2048, 2048
      %31 = vsyncadd [#allocation6], %s30
      %s32 = sshll.u32 [#allocation5], 4
      %s33 = int_to_ptr.vmem [resolvable:$true] %s32
      %38 = dma.hbm_to_vmem [thread:$0]  %s1, 2048, %s33, [#allocation6], 64, 64, 4
    $region9: #{tpu_custom_call.1} parent=1 // pred_fallthru
      _
    // Predicated region
    $region10: #{tpu_custom_call.1} parent=1 // pred_check
      _
    $region11: #{tpu_custom_call.1} parent=1 // pred_check_branch
      %40 = sbr.rel (0) target = $region13
    $region12: #{tpu_custom_call.1} parent=1 // pred_region
      %s42 = ssub.s32 1024, 1024
      %43 = vsyncadd [#allocation6], %s42
      %s44 = sshll.u32 [#allocation7], 4
      %s45 = int_to_ptr.vmem [resolvable:$true] %s44
      %50 = dma.hbm_to_vmem [thread:$0]  %s2, 1024, %s45, [#allocation6], 64, 64, 4
    $region13: #{tpu_custom_call.1} parent=1 // pred_fallthru
      _
    // Predicated region
    $region14: #{tpu_custom_call.1} parent=1 // pred_check
      _
    $region15: #{tpu_custom_call.1} parent=1 // pred_check_branch
      %52 = sbr.rel (0) target = $region17
    $region16: #{tpu_custom_call.1} parent=1 // pred_region
      _
    $region17: #{tpu_custom_call.1} parent=1 // pred_fallthru
      _
    // Predicated region
    $region18: #{tpu_custom_call.1} parent=1 // pred_check
      _
    $region19: #{tpu_custom_call.1} parent=1 // pred_check_branch
      %54 = sbr.rel (0) target = $region21
    $region20: #{tpu_custom_call.1} parent=1 // pred_region
      %s56 = ssub.s32 1024, 1024
      %57 = vsyncadd [#allocation9], %s56
      %s58 = sshll.u32 [#allocation8], 4
      %s59 = int_to_ptr.vmem [resolvable:$true] %s58
      %64 = dma.hbm_to_vmem [thread:$0]  %s4, 1024, %s59, [#allocation9], 64, 64, 4
    $region21: #{tpu_custom_call.1} parent=1 // pred_fallthru
      _
    // Predicated region
    $region22: #{tpu_custom_call.1} parent=1 // pred_check
      _
    $region23: #{tpu_custom_call.1} parent=1 // pred_check_branch
      %66 = sbr.rel (0) target = $region25
    $region24: #{tpu_custom_call.1} parent=1 // pred_region
      _
    $region25: #{tpu_custom_call.1} parent=1 // pred_fallthru
      _
    // Predicated region
    $region26: #{tpu_custom_call.1} parent=1 // pred_check
      _
    $region27: #{tpu_custom_call.1} parent=1 // pred_check_branch
      %68 = sbr.rel (0) target = $region29
    $region28: #{tpu_custom_call.1} parent=1 // pred_region
      %69 = dma.done [#allocation3], 4096
    $region29: #{tpu_custom_call.1} parent=1 // pred_fallthru
      _
    // Predicated region
    $region30: #{tpu_custom_call.1} parent=1 // pred_check
      _
    $region31: #{tpu_custom_call.1} parent=1 // pred_check_branch
      %71 = sbr.rel (0) target = $region33
    $region32: #{tpu_custom_call.1} parent=1 // pred_region
      %72 = dma.done [#allocation6], 2048
    $region33: #{tpu_custom_call.1} parent=1 // pred_fallthru
      _
    // Predicated region
    $region34: #{tpu_custom_call.1} parent=1 // pred_check
      _
    $region35: #{tpu_custom_call.1} parent=1 // pred_check_branch
      %74 = sbr.rel (0) target = $region37
    $region36: #{tpu_custom_call.1} parent=1 // pred_region
      %75 = dma.done [#allocation6], 1024
    $region37: #{tpu_custom_call.1} parent=1 // pred_fallthru
      _
    // Predicated region
    $region38: #{tpu_custom_call.1} parent=1 // pred_check
      _
    $region39: #{tpu_custom_call.1} parent=1 // pred_check_branch
      %77 = sbr.rel (0) target = $region41
    $region40: #{tpu_custom_call.1} parent=1 // pred_region
      %78 = dma.done [#allocation9], 1024
    $region41: #{tpu_custom_call.1} parent=1 // pred_fallthru
      _
    %v80 = vld [vmem:[#allocation2] sm:$0xff]
    %v81 = vld [vmem:[#allocation2 + $0x8] sm:$0xff]
    %v82 = vld [vmem:[#allocation2 + $0x10] sm:$0xff]
    %v83 = vld [vmem:[#allocation2 + $0x18] sm:$0xff]
    %v84 = vld [vmem:[#allocation2 + $0x20] sm:$0xff]
    %v85 = vld [vmem:[#allocation2 + $0x28] sm:$0xff]
    %v86 = vld [vmem:[#allocation2 + $0x30] sm:$0xff]
    %v87 = vld [vmem:[#allocation2 + $0x38] sm:$0xff]
    %v88 = vld [vmem:[#allocation2 + $0x40] sm:$0xff]
    %v89 = vld [vmem:[#allocation2 + $0x48] sm:$0xff]
    %v90 = vld [vmem:[#allocation2 + $0x50] sm:$0xff]
    %v91 = vld [vmem:[#allocation2 + $0x58] sm:$0xff]
    %v92 = vld [vmem:[#allocation2 + $0x60] sm:$0xff]
    %v93 = vld [vmem:[#allocation2 + $0x68] sm:$0xff]
    %v94 = vld [vmem:[#allocation2 + $0x70] sm:$0xff]
    %v95 = vld [vmem:[#allocation2 + $0x78] sm:$0xff]
    %v96 = vld [vmem:[#allocation2 + $0x80] sm:$0xff]
    %v97 = vld [vmem:[#allocation2 + $0x88] sm:$0xff]
    %v98 = vld [vmem:[#allocation2 + $0x90] sm:$0xff]
    %v99 = vld [vmem:[#allocation2 + $0x98] sm:$0xff]
    %v100 = vld [vmem:[#allocation2 + $0xa0] sm:$0xff]
    %v101 = vld [vmem:[#allocation2 + $0xa8] sm:$0xff]
    %v102 = vld [vmem:[#allocation2 + $0xb0] sm:$0xff]
    %v103 = vld [vmem:[#allocation2 + $0xb8] sm:$0xff]
    %v104 = vld [vmem:[#allocation2 + $0xc0] sm:$0xff]
    %v105 = vld [vmem:[#allocation2 + $0xc8] sm:$0xff]
    %v106 = vld [vmem:[#allocation2 + $0xd0] sm:$0xff]
    %v107 = vld [vmem:[#allocation2 + $0xd8] sm:$0xff]
    %v108 = vld [vmem:[#allocation2 + $0xe0] sm:$0xff]
    %v109 = vld [vmem:[#allocation2 + $0xe8] sm:$0xff]
    %v110 = vld [vmem:[#allocation2 + $0xf0] sm:$0xff]
    %v111 = vld [vmem:[#allocation2 + $0xf8] sm:$0xff]
    %v112 = vld [vmem:[#allocation5] sm:$0xf]
    %v113 = vld [vmem:[#allocation5 + $0x4] sm:$0xf]
    %v114 = vld [vmem:[#allocation5 + $0x8] sm:$0xf]
    %v115 = vld [vmem:[#allocation5 + $0xc] sm:$0xf]
    %v116 = vld [vmem:[#allocation5 + $0x10] sm:$0xf]
    %v117 = vld [vmem:[#allocation5 + $0x14] sm:$0xf]
    %v118 = vld [vmem:[#allocation5 + $0x18] sm:$0xf]
    %v119 = vld [vmem:[#allocation5 + $0x1c] sm:$0xf]
    %v120 = vld [vmem:[#allocation5 + $0x20] sm:$0xf]
    %v121 = vld [vmem:[#allocation5 + $0x24] sm:$0xf]
    %v122 = vld [vmem:[#allocation5 + $0x28] sm:$0xf]
    %v123 = vld [vmem:[#allocation5 + $0x2c] sm:$0xf]
    %v124 = vld [vmem:[#allocation5 + $0x30] sm:$0xf]
    %v125 = vld [vmem:[#allocation5 + $0x34] sm:$0xf]
    %v126 = vld [vmem:[#allocation5 + $0x38] sm:$0xf]
    %v127 = vld [vmem:[#allocation5 + $0x3c] sm:$0xf]
    %v128 = vld [vmem:[#allocation5 + $0x40] sm:$0xf]
    %v129 = vld [vmem:[#allocation5 + $0x44] sm:$0xf]
    %v130 = vld [vmem:[#allocation5 + $0x48] sm:$0xf]
    %v131 = vld [vmem:[#allocation5 + $0x4c] sm:$0xf]
    %v132 = vld [vmem:[#allocation5 + $0x50] sm:$0xf]
    %v133 = vld [vmem:[#allocation5 + $0x54] sm:$0xf]
    %v134 = vld [vmem:[#allocation5 + $0x58] sm:$0xf]
    %v135 = vld [vmem:[#allocation5 + $0x5c] sm:$0xf]
    %v136 = vld [vmem:[#allocation5 + $0x60] sm:$0xf]
    %v137 = vld [vmem:[#allocation5 + $0x64] sm:$0xf]
    %v138 = vld [vmem:[#allocation5 + $0x68] sm:$0xf]
    %v139 = vld [vmem:[#allocation5 + $0x6c] sm:$0xf]
    %v140 = vld [vmem:[#allocation5 + $0x70] sm:$0xf]
    %v141 = vld [vmem:[#allocation5 + $0x74] sm:$0xf]
    %v142 = vld [vmem:[#allocation5 + $0x78] sm:$0xf]
    %v143 = vld [vmem:[#allocation5 + $0x7c] sm:$0xf]
    %v176 = vunpack.c.l.b16 %v80
    %v177 = vunpack.c.h.b16 %v80
    %v178 = vunpack.c.l.b16 %v81
    %v179 = vunpack.c.h.b16 %v81
    %v180 = vunpack.c.l.b16 %v82
    %v181 = vunpack.c.h.b16 %v82
    %v182 = vunpack.c.l.b16 %v83
    %v183 = vunpack.c.h.b16 %v83
    %v184 = vunpack.c.l.b16 %v84
    %v185 = vunpack.c.h.b16 %v84
    %v186 = vunpack.c.l.b16 %v85
    %v187 = vunpack.c.h.b16 %v85
    %v188 = vunpack.c.l.b16 %v86
    %v189 = vunpack.c.h.b16 %v86
    %v190 = vunpack.c.l.b16 %v87
    %v191 = vunpack.c.h.b16 %v87
    %v192 = vunpack.c.l.b16 %v88
    %v193 = vunpack.c.h.b16 %v88
    %v194 = vunpack.c.l.b16 %v89
    %v195 = vunpack.c.h.b16 %v89
    %v196 = vunpack.c.l.b16 %v90
    %v197 = vunpack.c.h.b16 %v90
    %v198 = vunpack.c.l.b16 %v91
    %v199 = vunpack.c.h.b16 %v91
    %v200 = vunpack.c.l.b16 %v92
    %v201 = vunpack.c.h.b16 %v92
    %v202 = vunpack.c.l.b16 %v93
    %v203 = vunpack.c.h.b16 %v93
    %v204 = vunpack.c.l.b16 %v94
    %v205 = vunpack.c.h.b16 %v94
    %v206 = vunpack.c.l.b16 %v95
    %v207 = vunpack.c.h.b16 %v95
    %v208 = vunpack.c.l.b16 %v96
    %v209 = vunpack.c.h.b16 %v96
    %v210 = vunpack.c.l.b16 %v97
    %v211 = vunpack.c.h.b16 %v97
    %v212 = vunpack.c.l.b16 %v98
    %v213 = vunpack.c.h.b16 %v98
    %v214 = vunpack.c.l.b16 %v99
    %v215 = vunpack.c.h.b16 %v99
    %v216 = vunpack.c.l.b16 %v100
    %v217 = vunpack.c.h.b16 %v100
    %v218 = vunpack.c.l.b16 %v101
    %v219 = vunpack.c.h.b16 %v101
    %v220 = vunpack.c.l.b16 %v102
    %v221 = vunpack.c.h.b16 %v102
    %v222 = vunpack.c.l.b16 %v103
    %v223 = vunpack.c.h.b16 %v103
    %v224 = vunpack.c.l.b16 %v104
    %v225 = vunpack.c.h.b16 %v104
    %v226 = vunpack.c.l.b16 %v105
    %v227 = vunpack.c.h.b16 %v105
    %v228 = vunpack.c.l.b16 %v106
    %v229 = vunpack.c.h.b16 %v106
    %v230 = vunpack.c.l.b16 %v107
    %v231 = vunpack.c.h.b16 %v107
    %v232 = vunpack.c.l.b16 %v108
    %v233 = vunpack.c.h.b16 %v108
    %v234 = vunpack.c.l.b16 %v109
    %v235 = vunpack.c.h.b16 %v109
    %v236 = vunpack.c.l.b16 %v110
    %v237 = vunpack.c.h.b16 %v110
    %v238 = vunpack.c.l.b16 %v111
    %v239 = vunpack.c.h.b16 %v111
    %v240 = vpack.c.b16 %v178, %v176
    %v241 = vpack.c.b16 %v179, %v177
    %v242 = vpack.c.b16 %v182, %v180
    %v243 = vpack.c.b16 %v183, %v181
    %v244 = vpack.c.b16 %v186, %v184
    %v245 = vpack.c.b16 %v187, %v185
    %v246 = vpack.c.b16 %v190, %v188
    %v247 = vpack.c.b16 %v191, %v189
    %v248 = vpack.c.b16 %v194, %v192
    %v249 = vpack.c.b16 %v195, %v193
    %v250 = vpack.c.b16 %v198, %v196
    %v251 = vpack.c.b16 %v199, %v197
    %v252 = vpack.c.b16 %v202, %v200
    %v253 = vpack.c.b16 %v203, %v201
    %v254 = vpack.c.b16 %v206, %v204
    %v255 = vpack.c.b16 %v207, %v205
    %v256 = vpack.c.b16 %v210, %v208
    %v257 = vpack.c.b16 %v211, %v209
    %v258 = vpack.c.b16 %v214, %v212
    %v259 = vpack.c.b16 %v215, %v213
    %v260 = vpack.c.b16 %v218, %v216
    %v261 = vpack.c.b16 %v219, %v217
    %v262 = vpack.c.b16 %v222, %v220
    %v263 = vpack.c.b16 %v223, %v221
    %v264 = vpack.c.b16 %v226, %v224
    %v265 = vpack.c.b16 %v227, %v225
    %v266 = vpack.c.b16 %v230, %v228
    %v267 = vpack.c.b16 %v231, %v229
    %v268 = vpack.c.b16 %v234, %v232
    %v269 = vpack.c.b16 %v235, %v233
    %v270 = vpack.c.b16 %v238, %v236
    %v271 = vpack.c.b16 %v239, %v237
    %v336 = vunpack.c.l.b16 %v112
    %v337 = vunpack.c.l.b16 %v113
    %v338 = vunpack.c.l.b16 %v114
    %v339 = vunpack.c.l.b16 %v115
    %v340 = vunpack.c.l.b16 %v116
    %v341 = vunpack.c.l.b16 %v117
    %v342 = vunpack.c.l.b16 %v118
    %v343 = vunpack.c.l.b16 %v119
    %v344 = vunpack.c.l.b16 %v120
    %v345 = vunpack.c.l.b16 %v121
    %v346 = vunpack.c.l.b16 %v122
    %v347 = vunpack.c.l.b16 %v123
    %v348 = vunpack.c.l.b16 %v124
    %v349 = vunpack.c.l.b16 %v125
    %v350 = vunpack.c.l.b16 %v126
    %v351 = vunpack.c.l.b16 %v127
    %v352 = vunpack.c.l.b16 %v128
    %v353 = vunpack.c.l.b16 %v129
    %v354 = vunpack.c.l.b16 %v130
    %v355 = vunpack.c.l.b16 %v131
    %v356 = vunpack.c.l.b16 %v132
    %v357 = vunpack.c.l.b16 %v133
    %v358 = vunpack.c.l.b16 %v134
    %v359 = vunpack.c.l.b16 %v135
    %v360 = vunpack.c.l.b16 %v136
    %v361 = vunpack.c.l.b16 %v137
    %v362 = vunpack.c.l.b16 %v138
    %v363 = vunpack.c.l.b16 %v139
    %v364 = vunpack.c.l.b16 %v140
    %v365 = vunpack.c.l.b16 %v141
    %v366 = vunpack.c.l.b16 %v142
    %v367 = vunpack.c.l.b16 %v143
    %v368 = vpack.c.b16 %v337, %v336
    %v369 = vpack.c.b16 %v339, %v338
    %v370 = vpack.c.b16 %v341, %v340
    %v371 = vpack.c.b16 %v343, %v342
    %v372 = vpack.c.b16 %v345, %v344
    %v373 = vpack.c.b16 %v347, %v346
    %v374 = vpack.c.b16 %v349, %v348
    %v375 = vpack.c.b16 %v351, %v350
    %v376 = vpack.c.b16 %v353, %v352
    %v377 = vpack.c.b16 %v355, %v354
    %v378 = vpack.c.b16 %v357, %v356
    %v379 = vpack.c.b16 %v359, %v358
    %v380 = vpack.c.b16 %v361, %v360
    %v381 = vpack.c.b16 %v363, %v362
    %v382 = vpack.c.b16 %v365, %v364
    %v383 = vpack.c.b16 %v367, %v366
    %400 = vmatprep.subr.bf16.mxu0 0
    %401 = vmatpush1.bf16.msra.mxu0 %v368
    %402 = vmatprep.subr.bf16.mxu0 0
    %403 = vmatpush1.bf16.msra.mxu0 %v369
    %404 = vmatprep.subr.bf16.mxu0 0
    %405 = vmatpush1.bf16.msra.mxu0 %v370
    %406 = vmatprep.subr.bf16.mxu0 0
    %407 = vmatpush1.bf16.msra.mxu0 %v371
    %408 = vmatprep.subr.bf16.mxu0 0
    %409 = vmatpush1.bf16.msra.mxu0 %v372
    %410 = vmatprep.subr.bf16.mxu0 0
    %411 = vmatpush1.bf16.msra.mxu0 %v373
    %412 = vmatprep.subr.bf16.mxu0 0
    %413 = vmatpush1.bf16.msra.mxu0 %v374
    %414 = vmatprep.subr.bf16.mxu0 0
    %415 = vmatpush1.bf16.msra.mxu0 %v375
    %416 = vmatprep.subr.bf16.mxu0 0
    %417 = vmatpush1.bf16.msra.mxu0 %v376
    %418 = vmatprep.subr.bf16.mxu0 0
    %419 = vmatpush1.bf16.msra.mxu0 %v377
    %420 = vmatprep.subr.bf16.mxu0 0
    %421 = vmatpush1.bf16.msra.mxu0 %v378
    %422 = vmatprep.subr.bf16.mxu0 0
    %423 = vmatpush1.bf16.msra.mxu0 %v379
    %424 = vmatprep.subr.bf16.mxu0 0
    %425 = vmatpush1.bf16.msra.mxu0 %v380
    %426 = vmatprep.subr.bf16.mxu0 0
    %427 = vmatpush1.bf16.msra.mxu0 %v381
    %428 = vmatprep.subr.bf16.mxu0 0
    %429 = vmatpush1.bf16.msra.mxu0 %v382
    %430 = vmatprep.subr.bf16.mxu0 0
    %431 = vmatpush1.bf16.msra.mxu0 %v383
    %432 = vmatprep.mubr.bf16.mxu0 %v241
    %433 = vmatmul.mubr.bf16.gmra.mrb[0].mxu0 %v240
    %v434 = vpop.f32.mrb[0].mxu0
    %v435 = vadd.f32 0.0, %v434
    %v436 = vpop.f32.mrb[0].mxu0
    %v437 = vpop.f32.mrb[0].mxu0
    %v438 = vadd.f32 0.0, %v437
    %v439 = vpop.f32.mrb[0].mxu0
    %440 = vmatprep.mubr.bf16.mxu0 %v243
    %441 = vmatmul.mubr.bf16.gmra.mrb[0].mxu0 %v242
    %v442 = vpop.f32.mrb[0].mxu0
    %v443 = vadd.f32 0.0, %v442
    %v444 = vpop.f32.mrb[0].mxu0
    %v445 = vpop.f32.mrb[0].mxu0
    %v446 = vadd.f32 0.0, %v445
    %v447 = vpop.f32.mrb[0].mxu0
    %448 = vmatprep.mubr.bf16.mxu0 %v245
    %449 = vmatmul.mubr.bf16.gmra.mrb[0].mxu0 %v244
    %v450 = vpop.f32.mrb[0].mxu0
    %v451 = vadd.f32 0.0, %v450
    %v452 = vpop.f32.mrb[0].mxu0
    %v453 = vpop.f32.mrb[0].mxu0
    %v454 = vadd.f32 0.0, %v453
    %v455 = vpop.f32.mrb[0].mxu0
    %456 = vmatprep.mubr.bf16.mxu0 %v247
    %457 = vmatmul.mubr.bf16.gmra.mrb[0].mxu0 %v246
    %v458 = vpop.f32.mrb[0].mxu0
    %v459 = vadd.f32 0.0, %v458
    %v460 = vpop.f32.mrb[0].mxu0
    %v461 = vpop.f32.mrb[0].mxu0
    %v462 = vadd.f32 0.0, %v461
    %v463 = vpop.f32.mrb[0].mxu0
    %464 = vmatprep.mubr.bf16.mxu0 %v249
    %465 = vmatmul.mubr.bf16.gmra.mrb[0].mxu0 %v248
    %v466 = vpop.f32.mrb[0].mxu0
    %v467 = vadd.f32 0.0, %v466
    %v468 = vpop.f32.mrb[0].mxu0
    %v469 = vpop.f32.mrb[0].mxu0
    %v470 = vadd.f32 0.0, %v469
    %v471 = vpop.f32.mrb[0].mxu0
    %472 = vmatprep.mubr.bf16.mxu0 %v251
    %473 = vmatmul.mubr.bf16.gmra.mrb[0].mxu0 %v250
    %v474 = vpop.f32.mrb[0].mxu0
    %v475 = vadd.f32 0.0, %v474
    %v476 = vpop.f32.mrb[0].mxu0
    %v477 = vpop.f32.mrb[0].mxu0
    %v478 = vadd.f32 0.0, %v477
    %v479 = vpop.f32.mrb[0].mxu0
    %480 = vmatprep.mubr.bf16.mxu0 %v253
    %481 = vmatmul.mubr.bf16.gmra.mrb[0].mxu0 %v252
    %v482 = vpop.f32.mrb[0].mxu0
    %v483 = vadd.f32 0.0, %v482
    %v484 = vpop.f32.mrb[0].mxu0
    %v485 = vpop.f32.mrb[0].mxu0
    %v486 = vadd.f32 0.0, %v485
    %v487 = vpop.f32.mrb[0].mxu0
    %488 = vmatprep.mubr.bf16.mxu0 %v255
    %489 = vmatmul.mubr.bf16.gmra.mrb[0].mxu0 %v254
    %v490 = vpop.f32.mrb[0].mxu0
    %v491 = vadd.f32 0.0, %v490
    %v492 = vpop.f32.mrb[0].mxu0
    %v493 = vpop.f32.mrb[0].mxu0
    %v494 = vadd.f32 0.0, %v493
    %v495 = vpop.f32.mrb[0].mxu0
    %496 = vmatprep.mubr.bf16.mxu0 %v257
    %497 = vmatmul.mubr.bf16.gmra.mrb[0].mxu0 %v256
    %v498 = vpop.f32.mrb[0].mxu0
    %v499 = vadd.f32 0.0, %v498
    %v500 = vpop.f32.mrb[0].mxu0
    %v501 = vpop.f32.mrb[0].mxu0
    %v502 = vadd.f32 0.0, %v501
    %v503 = vpop.f32.mrb[0].mxu0
    %504 = vmatprep.mubr.bf16.mxu0 %v259
    %505 = vmatmul.mubr.bf16.gmra.mrb[0].mxu0 %v258
    %v506 = vpop.f32.mrb[0].mxu0
    %v507 = vadd.f32 0.0, %v506
    %v508 = vpop.f32.mrb[0].mxu0
    %v509 = vpop.f32.mrb[0].mxu0
    %v510 = vadd.f32 0.0, %v509
    %v511 = vpop.f32.mrb[0].mxu0
    %512 = vmatprep.mubr.bf16.mxu0 %v261
    %513 = vmatmul.mubr.bf16.gmra.mrb[0].mxu0 %v260
    %v514 = vpop.f32.mrb[0].mxu0
    %v515 = vadd.f32 0.0, %v514
    %v516 = vpop.f32.mrb[0].mxu0
    %v517 = vpop.f32.mrb[0].mxu0
    %v518 = vadd.f32 0.0, %v517
    %v519 = vpop.f32.mrb[0].mxu0
    %520 = vmatprep.mubr.bf16.mxu0 %v263
    %521 = vmatmul.mubr.bf16.gmra.mrb[0].mxu0 %v262
    %v522 = vpop.f32.mrb[0].mxu0
    %v523 = vadd.f32 0.0, %v522
    %v524 = vpop.f32.mrb[0].mxu0
    %v525 = vpop.f32.mrb[0].mxu0
    %v526 = vadd.f32 0.0, %v525
    %v527 = vpop.f32.mrb[0].mxu0
    %528 = vmatprep.mubr.bf16.mxu0 %v265
    %529 = vmatmul.mubr.bf16.gmra.mrb[0].mxu0 %v264
    %v530 = vpop.f32.mrb[0].mxu0
    %v531 = vadd.f32 0.0, %v530
    %v532 = vpop.f32.mrb[0].mxu0
    %v533 = vpop.f32.mrb[0].mxu0
    %v534 = vadd.f32 0.0, %v533
    %v535 = vpop.f32.mrb[0].mxu0
    %536 = vmatprep.mubr.bf16.mxu0 %v267
    %537 = vmatmul.mubr.bf16.gmra.mrb[0].mxu0 %v266
    %v538 = vpop.f32.mrb[0].mxu0
    %v539 = vadd.f32 0.0, %v538
    %v540 = vpop.f32.mrb[0].mxu0
    %v541 = vpop.f32.mrb[0].mxu0
    %v542 = vadd.f32 0.0, %v541
    %v543 = vpop.f32.mrb[0].mxu0
    %544 = vmatprep.mubr.bf16.mxu0 %v269
    %545 = vmatmul.mubr.bf16.gmra.mrb[0].mxu0 %v268
    %v546 = vpop.f32.mrb[0].mxu0
    %v547 = vadd.f32 0.0, %v546
    %v548 = vpop.f32.mrb[0].mxu0
    %v549 = vpop.f32.mrb[0].mxu0
    %v550 = vadd.f32 0.0, %v549
    %v551 = vpop.f32.mrb[0].mxu0
    %552 = vmatprep.mubr.bf16.mxu0 %v271
    %553 = vmatmul.mubr.bf16.gmra.mrb[0].mxu0 %v270
    %v554 = vpop.f32.mrb[0].mxu0
    %v555 = vadd.f32 0.0, %v554
    %v556 = vpop.f32.mrb[0].mxu0
    %v557 = vpop.f32.mrb[0].mxu0
    %v558 = vadd.f32 0.0, %v557
    %v559 = vpop.f32.mrb[0].mxu0
    %560 = vdwg.mxu0
    %v561 = vpack.c.bf16 %v438, %v435
    %v562 = vpack.c.bf16 %v446, %v443
    %v563 = vpack.c.bf16 %v454, %v451
    %v564 = vpack.c.bf16 %v462, %v459
    %v565 = vpack.c.bf16 %v470, %v467
    %v566 = vpack.c.bf16 %v478, %v475
    %v567 = vpack.c.bf16 %v486, %v483
    %v568 = vpack.c.bf16 %v494, %v491
    %v569 = vpack.c.bf16 %v502, %v499
    %v570 = vpack.c.bf16 %v510, %v507
    %v571 = vpack.c.bf16 %v518, %v515
    %v572 = vpack.c.bf16 %v526, %v523
    %v573 = vpack.c.bf16 %v534, %v531
    %v574 = vpack.c.bf16 %v542, %v539
    %v575 = vpack.c.bf16 %v550, %v547
    %v576 = vpack.c.bf16 %v558, %v555
    %v577 = vld [vmem:[#allocation7] sm:$0xf]
    %v578 = vld [vmem:[#allocation7 + $0x4] sm:$0xf]
    %v579 = vld [vmem:[#allocation7 + $0x8] sm:$0xf]
    %v580 = vld [vmem:[#allocation7 + $0xc] sm:$0xf]
    %v581 = vld [vmem:[#allocation7 + $0x10] sm:$0xf]
    %v582 = vld [vmem:[#allocation7 + $0x14] sm:$0xf]
    %v583 = vld [vmem:[#allocation7 + $0x18] sm:$0xf]
    %v584 = vld [vmem:[#allocation7 + $0x1c] sm:$0xf]
    %v585 = vld [vmem:[#allocation7 + $0x20] sm:$0xf]
    %v586 = vld [vmem:[#allocation7 + $0x24] sm:$0xf]
    %v587 = vld [vmem:[#allocation7 + $0x28] sm:$0xf]
    %v588 = vld [vmem:[#allocation7 + $0x2c] sm:$0xf]
    %v589 = vld [vmem:[#allocation7 + $0x30] sm:$0xf]
    %v590 = vld [vmem:[#allocation7 + $0x34] sm:$0xf]
    %v591 = vld [vmem:[#allocation7 + $0x38] sm:$0xf]
    %v592 = vld [vmem:[#allocation7 + $0x3c] sm:$0xf]
    %v593 = vld [vmem:[%s3] sm:$0x1]
    %v595 = vlaneseq
    %v596 = vshrl.u32 %v595, 7
    %v597 = vsub.s32 0, %v596
    %v598 = vrot.slane %v593, %v597
    %v616 = vunpack.c.l.b16 %v577
    %v617 = vunpack.c.l.b16 %v578
    %v618 = vunpack.c.l.b16 %v579
    %v619 = vunpack.c.l.b16 %v580
    %v620 = vunpack.c.l.b16 %v581
    %v621 = vunpack.c.l.b16 %v582
    %v622 = vunpack.c.l.b16 %v583
    %v623 = vunpack.c.l.b16 %v584
    %v624 = vunpack.c.l.b16 %v585
    %v625 = vunpack.c.l.b16 %v586
    %v626 = vunpack.c.l.b16 %v587
    %v627 = vunpack.c.l.b16 %v588
    %v628 = vunpack.c.l.b16 %v589
    %v629 = vunpack.c.l.b16 %v590
    %v630 = vunpack.c.l.b16 %v591
    %v631 = vunpack.c.l.b16 %v592
    %v632 = vpack.c.b16 %v617, %v616
    %v633 = vpack.c.b16 %v619, %v618
    %v634 = vpack.c.b16 %v621, %v620
    %v635 = vpack.c.b16 %v623, %v622
    %v636 = vpack.c.b16 %v625, %v624
    %v637 = vpack.c.b16 %v627, %v626
    %v638 = vpack.c.b16 %v629, %v628
    %v639 = vpack.c.b16 %v631, %v630
    %648 = vmatprep.subr.bf16.mxu0 0
    %649 = vmatpush1.bf16.msra.mxu0 %v632
    %650 = vmatprep.subr.bf16.mxu0 0
    %651 = vmatpush1.bf16.msra.mxu0 %v633
    %652 = vmatprep.subr.bf16.mxu0 0
    %653 = vmatpush1.bf16.msra.mxu0 %v634
    %654 = vmatprep.subr.bf16.mxu0 0
    %655 = vmatpush1.bf16.msra.mxu0 %v635
    %656 = vmatprep.subr.bf16.mxu0 0
    %657 = vmatpush1.bf16.msra.mxu0 %v636
    %658 = vmatprep.subr.bf16.mxu0 0
    %659 = vmatpush1.bf16.msra.mxu0 %v637
    %660 = vmatprep.subr.bf16.mxu0 0
    %661 = vmatpush1.bf16.msra.mxu0 %v638
    %662 = vmatprep.subr.bf16.mxu0 0
    %663 = vmatpush1.bf16.msra.mxu0 %v639
    %664 = vmatprep.subr.bf16.mxu0 0
    %665 = vmatpush1.bf16.msra.mxu0 0
    %666 = vmatprep.subr.bf16.mxu0 0
    %667 = vmatpush1.bf16.msra.mxu0 0
    %668 = vmatprep.subr.bf16.mxu0 0
    %669 = vmatpush1.bf16.msra.mxu0 0
    %670 = vmatprep.subr.bf16.mxu0 0
    %671 = vmatpush1.bf16.msra.mxu0 0
    %672 = vmatprep.subr.bf16.mxu0 0
    %673 = vmatpush1.bf16.msra.mxu0 0
    %674 = vmatprep.subr.bf16.mxu0 0
    %675 = vmatpush1.bf16.msra.mxu0 0
    %676 = vmatprep.subr.bf16.mxu0 0
    %677 = vmatpush1.bf16.msra.mxu0 0
    %678 = vmatprep.subr.bf16.mxu0 0
    %679 = vmatpush1.bf16.msra.mxu0 0
    %680 = vmatprep.mubr.bf16.mxu0 0
    %681 = vmatmul.mubr.bf16.gmra.mrb[0].mxu0 %v561
    %v682 = vpop.f32.mrb[0].mxu0
    %v683 = vadd.f32 %v598, %v682
    %v684 = vpop.f32.mrb[0].mxu0
    %v685 = vpop.f32.mrb[0].mxu0
    %v686 = vadd.f32 %v598, %v685
    %v687 = vpop.f32.mrb[0].mxu0
    %688 = vmatprep.mubr.bf16.mxu0 0
    %689 = vmatmul.mubr.bf16.gmra.mrb[0].mxu0 %v562
    %v690 = vpop.f32.mrb[0].mxu0
    %v691 = vadd.f32 %v598, %v690
    %v692 = vpop.f32.mrb[0].mxu0
    %v693 = vpop.f32.mrb[0].mxu0
    %v694 = vadd.f32 %v598, %v693
    %v695 = vpop.f32.mrb[0].mxu0
    %696 = vmatprep.mubr.bf16.mxu0 0
    %697 = vmatmul.mubr.bf16.gmra.mrb[0].mxu0 %v563
    %v698 = vpop.f32.mrb[0].mxu0
    %v699 = vadd.f32 %v598, %v698
    %v700 = vpop.f32.mrb[0].mxu0
    %v701 = vpop.f32.mrb[0].mxu0
    %v702 = vadd.f32 %v598, %v701
    %v703 = vpop.f32.mrb[0].mxu0
    %704 = vmatprep.mubr.bf16.mxu0 0
    %705 = vmatmul.mubr.bf16.gmra.mrb[0].mxu0 %v564
    %v706 = vpop.f32.mrb[0].mxu0
    %v707 = vadd.f32 %v598, %v706
    %v708 = vpop.f32.mrb[0].mxu0
    %v709 = vpop.f32.mrb[0].mxu0
    %v710 = vadd.f32 %v598, %v709
    %v711 = vpop.f32.mrb[0].mxu0
    %712 = vmatprep.mubr.bf16.mxu0 0
    %713 = vmatmul.mubr.bf16.gmra.mrb[0].mxu0 %v565
    %v714 = vpop.f32.mrb[0].mxu0
    %v715 = vadd.f32 %v598, %v714
    %v716 = vpop.f32.mrb[0].mxu0
    %v717 = vpop.f32.mrb[0].mxu0
    %v718 = vadd.f32 %v598, %v717
    %v719 = vpop.f32.mrb[0].mxu0
    %720 = vmatprep.mubr.bf16.mxu0 0
    %721 = vmatmul.mubr.bf16.gmra.mrb[0].mxu0 %v566
    %v722 = vpop.f32.mrb[0].mxu0
    %v723 = vadd.f32 %v598, %v722
    %v724 = vpop.f32.mrb[0].mxu0
    %v725 = vpop.f32.mrb[0].mxu0
    %v726 = vadd.f32 %v598, %v725
    %v727 = vpop.f32.mrb[0].mxu0
    %728 = vmatprep.mubr.bf16.mxu0 0
    %729 = vmatmul.mubr.bf16.gmra.mrb[0].mxu0 %v567
    %v730 = vpop.f32.mrb[0].mxu0
    %v731 = vadd.f32 %v598, %v730
    %v732 = vpop.f32.mrb[0].mxu0
    %v733 = vpop.f32.mrb[0].mxu0
    %v734 = vadd.f32 %v598, %v733
    %v735 = vpop.f32.mrb[0].mxu0
    %736 = vmatprep.mubr.bf16.mxu0 0
    %737 = vmatmul.mubr.bf16.gmra.mrb[0].mxu0 %v568
    %v738 = vpop.f32.mrb[0].mxu0
    %v739 = vadd.f32 %v598, %v738
    %v740 = vpop.f32.mrb[0].mxu0
    %v741 = vpop.f32.mrb[0].mxu0
    %v742 = vadd.f32 %v598, %v741
    %v743 = vpop.f32.mrb[0].mxu0
    %744 = vmatprep.mubr.bf16.mxu0 0
    %745 = vmatmul.mubr.bf16.gmra.mrb[0].mxu0 %v569
    %v746 = vpop.f32.mrb[0].mxu0
    %v747 = vadd.f32 %v598, %v746
    %v748 = vpop.f32.mrb[0].mxu0
    %v749 = vpop.f32.mrb[0].mxu0
    %v750 = vadd.f32 %v598, %v749
    %v751 = vpop.f32.mrb[0].mxu0
    %752 = vmatprep.mubr.bf16.mxu0 0
    %753 = vmatmul.mubr.bf16.gmra.mrb[0].mxu0 %v570
    %v754 = vpop.f32.mrb[0].mxu0
    %v755 = vadd.f32 %v598, %v754
    %v756 = vpop.f32.mrb[0].mxu0
    %v757 = vpop.f32.mrb[0].mxu0
    %v758 = vadd.f32 %v598, %v757
    %v759 = vpop.f32.mrb[0].mxu0
    %760 = vmatprep.mubr.bf16.mxu0 0
    %761 = vmatmul.mubr.bf16.gmra.mrb[0].mxu0 %v571
    %v762 = vpop.f32.mrb[0].mxu0
    %v763 = vadd.f32 %v598, %v762
    %v764 = vpop.f32.mrb[0].mxu0
    %v765 = vpop.f32.mrb[0].mxu0
    %v766 = vadd.f32 %v598, %v765
    %v767 = vpop.f32.mrb[0].mxu0
    %768 = vmatprep.mubr.bf16.mxu0 0
    %769 = vmatmul.mubr.bf16.gmra.mrb[0].mxu0 %v572
    %v770 = vpop.f32.mrb[0].mxu0
    %v771 = vadd.f32 %v598, %v770
    %v772 = vpop.f32.mrb[0].mxu0
    %v773 = vpop.f32.mrb[0].mxu0
    %v774 = vadd.f32 %v598, %v773
    %v775 = vpop.f32.mrb[0].mxu0
    %776 = vmatprep.mubr.bf16.mxu0 0
    %777 = vmatmul.mubr.bf16.gmra.mrb[0].mxu0 %v573
    %v778 = vpop.f32.mrb[0].mxu0
    %v779 = vadd.f32 %v598, %v778
    %v780 = vpop.f32.mrb[0].mxu0
    %v781 = vpop.f32.mrb[0].mxu0
    %v782 = vadd.f32 %v598, %v781
    %v783 = vpop.f32.mrb[0].mxu0
    %784 = vmatprep.mubr.bf16.mxu0 0
    %785 = vmatmul.mubr.bf16.gmra.mrb[0].mxu0 %v574
    %v786 = vpop.f32.mrb[0].mxu0
    %v787 = vadd.f32 %v598, %v786
    %v788 = vpop.f32.mrb[0].mxu0
    %v789 = vpop.f32.mrb[0].mxu0
    %v790 = vadd.f32 %v598, %v789
    %v791 = vpop.f32.mrb[0].mxu0
    %792 = vmatprep.mubr.bf16.mxu0 0
    %793 = vmatmul.mubr.bf16.gmra.mrb[0].mxu0 %v575
    %v794 = vpop.f32.mrb[0].mxu0
    %v795 = vadd.f32 %v598, %v794
    %v796 = vpop.f32.mrb[0].mxu0
    %v797 = vpop.f32.mrb[0].mxu0
    %v798 = vadd.f32 %v598, %v797
    %v799 = vpop.f32.mrb[0].mxu0
    %800 = vmatprep.mubr.bf16.mxu0 0
    %801 = vmatmul.mubr.bf16.gmra.mrb[0].mxu0 %v576
    %v802 = vpop.f32.mrb[0].mxu0
    %v803 = vadd.f32 %v598, %v802
    %v804 = vpop.f32.mrb[0].mxu0
    %v805 = vpop.f32.mrb[0].mxu0
    %v806 = vadd.f32 %v598, %v805
    %v807 = vpop.f32.mrb[0].mxu0
    %808 = vdwg.mxu0
    %v809 = vmax.f32 %v683, 0.0
    %v810 = vmax.f32 %v686, 0.0
    %v811 = vmax.f32 %v691, 0.0
    %v812 = vmax.f32 %v694, 0.0
    %v813 = vmax.f32 %v699, 0.0
    %v814 = vmax.f32 %v702, 0.0
    %v815 = vmax.f32 %v707, 0.0
    %v816 = vmax.f32 %v710, 0.0
    %v817 = vmax.f32 %v715, 0.0
    %v818 = vmax.f32 %v718, 0.0
    %v819 = vmax.f32 %v723, 0.0
    %v820 = vmax.f32 %v726, 0.0
    %v821 = vmax.f32 %v731, 0.0
    %v822 = vmax.f32 %v734, 0.0
    %v823 = vmax.f32 %v739, 0.0
    %v824 = vmax.f32 %v742, 0.0
    %v825 = vmax.f32 %v747, 0.0
    %v826 = vmax.f32 %v750, 0.0
    %v827 = vmax.f32 %v755, 0.0
    %v828 = vmax.f32 %v758, 0.0
    %v829 = vmax.f32 %v763, 0.0
    %v830 = vmax.f32 %v766, 0.0
    %v831 = vmax.f32 %v771, 0.0
    %v832 = vmax.f32 %v774, 0.0
    %v833 = vmax.f32 %v779, 0.0
    %v834 = vmax.f32 %v782, 0.0
    %v835 = vmax.f32 %v787, 0.0
    %v836 = vmax.f32 %v790, 0.0
    %v837 = vmax.f32 %v795, 0.0
    %v838 = vmax.f32 %v798, 0.0
    %v839 = vmax.f32 %v803, 0.0
    %v840 = vmax.f32 %v806, 0.0
    %v841 = vpack.c.bf16 %v810, %v809
    %v842 = vpack.c.bf16 %v812, %v811
    %v843 = vpack.c.bf16 %v814, %v813
    %v844 = vpack.c.bf16 %v816, %v815
    %v845 = vpack.c.bf16 %v818, %v817
    %v846 = vpack.c.bf16 %v820, %v819
    %v847 = vpack.c.bf16 %v822, %v821
    %v848 = vpack.c.bf16 %v824, %v823
    %v849 = vpack.c.bf16 %v826, %v825
    %v850 = vpack.c.bf16 %v828, %v827
    %v851 = vpack.c.bf16 %v830, %v829
    %v852 = vpack.c.bf16 %v832, %v831
    %v853 = vpack.c.bf16 %v834, %v833
    %v854 = vpack.c.bf16 %v836, %v835
    %v855 = vpack.c.bf16 %v838, %v837
    %v856 = vpack.c.bf16 %v840, %v839
    %v857 = vld [vmem:[#allocation8] sm:$0xf]
    %v858 = vld [vmem:[#allocation8 + $0x4] sm:$0xf]
    %v859 = vld [vmem:[#allocation8 + $0x8] sm:$0xf]
    %v860 = vld [vmem:[#allocation8 + $0xc] sm:$0xf]
    %v861 = vld [vmem:[#allocation8 + $0x10] sm:$0xf]
    %v862 = vld [vmem:[#allocation8 + $0x14] sm:$0xf]
    %v863 = vld [vmem:[#allocation8 + $0x18] sm:$0xf]
    %v864 = vld [vmem:[#allocation8 + $0x1c] sm:$0xf]
    %v865 = vld [vmem:[#allocation8 + $0x20] sm:$0xf]
    %v866 = vld [vmem:[#allocation8 + $0x24] sm:$0xf]
    %v867 = vld [vmem:[#allocation8 + $0x28] sm:$0xf]
    %v868 = vld [vmem:[#allocation8 + $0x2c] sm:$0xf]
    %v869 = vld [vmem:[#allocation8 + $0x30] sm:$0xf]
    %v870 = vld [vmem:[#allocation8 + $0x34] sm:$0xf]
    %v871 = vld [vmem:[#allocation8 + $0x38] sm:$0xf]
    %v872 = vld [vmem:[#allocation8 + $0x3c] sm:$0xf]
    %v889 = vunpack.c.l.b16 %v857
    %v890 = vunpack.c.l.b16 %v858
    %v891 = vunpack.c.l.b16 %v859
    %v892 = vunpack.c.l.b16 %v860
    %v893 = vunpack.c.l.b16 %v861
    %v894 = vunpack.c.l.b16 %v862
    %v895 = vunpack.c.l.b16 %v863
    %v896 = vunpack.c.l.b16 %v864
    %v897 = vunpack.c.l.b16 %v865
    %v898 = vunpack.c.l.b16 %v866
    %v899 = vunpack.c.l.b16 %v867
    %v900 = vunpack.c.l.b16 %v868
    %v901 = vunpack.c.l.b16 %v869
    %v902 = vunpack.c.l.b16 %v870
    %v903 = vunpack.c.l.b16 %v871
    %v904 = vunpack.c.l.b16 %v872
    %v905 = vpack.c.b16 %v890, %v889
    %v906 = vpack.c.b16 %v892, %v891
    %v907 = vpack.c.b16 %v894, %v893
    %v908 = vpack.c.b16 %v896, %v895
    %v909 = vpack.c.b16 %v898, %v897
    %v910 = vpack.c.b16 %v900, %v899
    %v911 = vpack.c.b16 %v902, %v901
    %v912 = vpack.c.b16 %v904, %v903
    %921 = vmatprep.subr.bf16.mxu0 0
    %922 = vmatpush1.bf16.msra.mxu0 %v905
    %923 = vmatprep.subr.bf16.mxu0 0
    %924 = vmatpush1.bf16.msra.mxu0 %v906
    %925 = vmatprep.subr.bf16.mxu0 0
    %926 = vmatpush1.bf16.msra.mxu0 %v907
    %927 = vmatprep.subr.bf16.mxu0 0
    %928 = vmatpush1.bf16.msra.mxu0 %v908
    %929 = vmatprep.subr.bf16.mxu0 0
    %930 = vmatpush1.bf16.msra.mxu0 %v909
    %931 = vmatprep.subr.bf16.mxu0 0
    %932 = vmatpush1.bf16.msra.mxu0 %v910
    %933 = vmatprep.subr.bf16.mxu0 0
    %934 = vmatpush1.bf16.msra.mxu0 %v911
    %935 = vmatprep.subr.bf16.mxu0 0
    %936 = vmatpush1.bf16.msra.mxu0 %v912
    %937 = vmatprep.subr.bf16.mxu0 0
    %938 = vmatpush1.bf16.msra.mxu0 0
    %939 = vmatprep.subr.bf16.mxu0 0
    %940 = vmatpush1.bf16.msra.mxu0 0
    %941 = vmatprep.subr.bf16.mxu0 0
    %942 = vmatpush1.bf16.msra.mxu0 0
    %943 = vmatprep.subr.bf16.mxu0 0
    %944 = vmatpush1.bf16.msra.mxu0 0
    %945 = vmatprep.subr.bf16.mxu0 0
    %946 = vmatpush1.bf16.msra.mxu0 0
    %947 = vmatprep.subr.bf16.mxu0 0
    %948 = vmatpush1.bf16.msra.mxu0 0
    %949 = vmatprep.subr.bf16.mxu0 0
    %950 = vmatpush1.bf16.msra.mxu0 0
    %951 = vmatprep.subr.bf16.mxu0 0
    %952 = vmatpush1.bf16.msra.mxu0 0
    %953 = vmatprep.mubr.bf16.mxu0 0
    %954 = vmatmul.mubr.bf16.gmra.mrb[0].mxu0 %v841
    %v955 = vpop.f32.mrb[0].mxu0
    %v956 = vadd.f32 0.0, %v955
    %v957 = vpop.f32.mrb[0].mxu0
    %v958 = vpop.f32.mrb[0].mxu0
    %v959 = vadd.f32 0.0, %v958
    %v960 = vpop.f32.mrb[0].mxu0
    %961 = vmatprep.mubr.bf16.mxu0 0
    %962 = vmatmul.mubr.bf16.gmra.mrb[0].mxu0 %v842
    %v963 = vpop.f32.mrb[0].mxu0
    %v964 = vadd.f32 0.0, %v963
    %v965 = vpop.f32.mrb[0].mxu0
    %v966 = vpop.f32.mrb[0].mxu0
    %v967 = vadd.f32 0.0, %v966
    %v968 = vpop.f32.mrb[0].mxu0
    %969 = vmatprep.mubr.bf16.mxu0 0
    %970 = vmatmul.mubr.bf16.gmra.mrb[0].mxu0 %v843
    %v971 = vpop.f32.mrb[0].mxu0
    %v972 = vadd.f32 0.0, %v971
    %v973 = vpop.f32.mrb[0].mxu0
    %v974 = vpop.f32.mrb[0].mxu0
    %v975 = vadd.f32 0.0, %v974
    %v976 = vpop.f32.mrb[0].mxu0
    %977 = vmatprep.mubr.bf16.mxu0 0
    %978 = vmatmul.mubr.bf16.gmra.mrb[0].mxu0 %v844
    %v979 = vpop.f32.mrb[0].mxu0
    %v980 = vadd.f32 0.0, %v979
    %v981 = vpop.f32.mrb[0].mxu0
    %v982 = vpop.f32.mrb[0].mxu0
    %v983 = vadd.f32 0.0, %v982
    %v984 = vpop.f32.mrb[0].mxu0
    %985 = vmatprep.mubr.bf16.mxu0 0
    %986 = vmatmul.mubr.bf16.gmra.mrb[0].mxu0 %v845
    %v987 = vpop.f32.mrb[0].mxu0
    %v988 = vadd.f32 0.0, %v987
    %v989 = vpop.f32.mrb[0].mxu0
    %v990 = vpop.f32.mrb[0].mxu0
    %v991 = vadd.f32 0.0, %v990
    %v992 = vpop.f32.mrb[0].mxu0
    %993 = vmatprep.mubr.bf16.mxu0 0
    %994 = vmatmul.mubr.bf16.gmra.mrb[0].mxu0 %v846
    %v995 = vpop.f32.mrb[0].mxu0
    %v996 = vadd.f32 0.0, %v995
    %v997 = vpop.f32.mrb[0].mxu0
    %v998 = vpop.f32.mrb[0].mxu0
    %v999 = vadd.f32 0.0, %v998
    %v1000 = vpop.f32.mrb[0].mxu0
    %1001 = vmatprep.mubr.bf16.mxu0 0
    %1002 = vmatmul.mubr.bf16.gmra.mrb[0].mxu0 %v847
    %v1003 = vpop.f32.mrb[0].mxu0
    %v1004 = vadd.f32 0.0, %v1003
    %v1005 = vpop.f32.mrb[0].mxu0
    %v1006 = vpop.f32.mrb[0].mxu0
    %v1007 = vadd.f32 0.0, %v1006
    %v1008 = vpop.f32.mrb[0].mxu0
    %1009 = vmatprep.mubr.bf16.mxu0 0
    %1010 = vmatmul.mubr.bf16.gmra.mrb[0].mxu0 %v848
    %v1011 = vpop.f32.mrb[0].mxu0
    %v1012 = vadd.f32 0.0, %v1011
    %v1013 = vpop.f32.mrb[0].mxu0
    %v1014 = vpop.f32.mrb[0].mxu0
    %v1015 = vadd.f32 0.0, %v1014
    %v1016 = vpop.f32.mrb[0].mxu0
    %1017 = vmatprep.mubr.bf16.mxu0 0
    %1018 = vmatmul.mubr.bf16.gmra.mrb[0].mxu0 %v849
    %v1019 = vpop.f32.mrb[0].mxu0
    %v1020 = vadd.f32 0.0, %v1019
    %v1021 = vpop.f32.mrb[0].mxu0
    %v1022 = vpop.f32.mrb[0].mxu0
    %v1023 = vadd.f32 0.0, %v1022
    %v1024 = vpop.f32.mrb[0].mxu0
    %1025 = vmatprep.mubr.bf16.mxu0 0
    %1026 = vmatmul.mubr.bf16.gmra.mrb[0].mxu0 %v850
    %v1027 = vpop.f32.mrb[0].mxu0
    %v1028 = vadd.f32 0.0, %v1027
    %v1029 = vpop.f32.mrb[0].mxu0
    %v1030 = vpop.f32.mrb[0].mxu0
    %v1031 = vadd.f32 0.0, %v1030
    %v1032 = vpop.f32.mrb[0].mxu0
    %1033 = vmatprep.mubr.bf16.mxu0 0
    %1034 = vmatmul.mubr.bf16.gmra.mrb[0].mxu0 %v851
    %v1035 = vpop.f32.mrb[0].mxu0
    %v1036 = vadd.f32 0.0, %v1035
    %v1037 = vpop.f32.mrb[0].mxu0
    %v1038 = vpop.f32.mrb[0].mxu0
    %v1039 = vadd.f32 0.0, %v1038
    %v1040 = vpop.f32.mrb[0].mxu0
    %1041 = vmatprep.mubr.bf16.mxu0 0
    %1042 = vmatmul.mubr.bf16.gmra.mrb[0].mxu0 %v852
    %v1043 = vpop.f32.mrb[0].mxu0
    %v1044 = vadd.f32 0.0, %v1043
    %v1045 = vpop.f32.mrb[0].mxu0
    %v1046 = vpop.f32.mrb[0].mxu0
    %v1047 = vadd.f32 0.0, %v1046
    %v1048 = vpop.f32.mrb[0].mxu0
    %1049 = vmatprep.mubr.bf16.mxu0 0
    %1050 = vmatmul.mubr.bf16.gmra.mrb[0].mxu0 %v853
    %v1051 = vpop.f32.mrb[0].mxu0
    %v1052 = vadd.f32 0.0, %v1051
    %v1053 = vpop.f32.mrb[0].mxu0
    %v1054 = vpop.f32.mrb[0].mxu0
    %v1055 = vadd.f32 0.0, %v1054
    %v1056 = vpop.f32.mrb[0].mxu0
    %1057 = vmatprep.mubr.bf16.mxu0 0
    %1058 = vmatmul.mubr.bf16.gmra.mrb[0].mxu0 %v854
    %v1059 = vpop.f32.mrb[0].mxu0
    %v1060 = vadd.f32 0.0, %v1059
    %v1061 = vpop.f32.mrb[0].mxu0
    %v1062 = vpop.f32.mrb[0].mxu0
    %v1063 = vadd.f32 0.0, %v1062
    %v1064 = vpop.f32.mrb[0].mxu0
    %1065 = vmatprep.mubr.bf16.mxu0 0
    %1066 = vmatmul.mubr.bf16.gmra.mrb[0].mxu0 %v855
    %v1067 = vpop.f32.mrb[0].mxu0
    %v1068 = vadd.f32 0.0, %v1067
    %v1069 = vpop.f32.mrb[0].mxu0
    %v1070 = vpop.f32.mrb[0].mxu0
    %v1071 = vadd.f32 0.0, %v1070
    %v1072 = vpop.f32.mrb[0].mxu0
    %1073 = vmatprep.mubr.bf16.mxu0 0
    %1074 = vmatmul.mubr.bf16.gmra.mrb[0].mxu0 %v856
    %v1075 = vpop.f32.mrb[0].mxu0
    %v1076 = vadd.f32 0.0, %v1075
    %v1077 = vpop.f32.mrb[0].mxu0
    %v1078 = vpop.f32.mrb[0].mxu0
    %v1079 = vadd.f32 0.0, %v1078
    %v1080 = vpop.f32.mrb[0].mxu0
    %1081 = vdwg.mxu0
    %v1082 = vpack.c.bf16 %v959, %v956
    %v1083 = vpack.c.bf16 %v967, %v964
    %v1084 = vpack.c.bf16 %v975, %v972
    %v1085 = vpack.c.bf16 %v983, %v980
    %v1086 = vpack.c.bf16 %v991, %v988
    %v1087 = vpack.c.bf16 %v999, %v996
    %v1088 = vpack.c.bf16 %v1007, %v1004
    %v1089 = vpack.c.bf16 %v1015, %v1012
    %v1090 = vpack.c.bf16 %v1023, %v1020
    %v1091 = vpack.c.bf16 %v1031, %v1028
    %v1092 = vpack.c.bf16 %v1039, %v1036
    %v1093 = vpack.c.bf16 %v1047, %v1044
    %v1094 = vpack.c.bf16 %v1055, %v1052
    %v1095 = vpack.c.bf16 %v1063, %v1060
    %v1096 = vpack.c.bf16 %v1071, %v1068
    %v1097 = vpack.c.bf16 %v1079, %v1076
    %v1098 = vld [vmem:[%s5] sm:$0x1]
    %v1100 = vlaneseq
    %v1101 = vshrl.u32 %v1100, 7
    %v1102 = vsub.s32 0, %v1101
    %v1103 = vrot.slane %v1098, %v1102
    %1105 = vmatprep.subr.bf16.mxu0 0
    %1106 = vmatpush1.bf16.msra.mxu0 %v1082
    %1107 = vmatprep.subr.bf16.mxu0 0
    %1108 = vmatpush1.bf16.msra.mxu0 %v1083
    %1109 = vmatprep.subr.bf16.mxu0 0
    %1110 = vmatpush1.bf16.msra.mxu0 %v1084
    %1111 = vmatprep.subr.bf16.mxu0 0
    %1112 = vmatpush1.bf16.msra.mxu0 %v1085
    %1113 = vmatprep.subr.bf16.mxu0 0
    %1114 = vmatpush1.bf16.msra.mxu0 %v1086
    %1115 = vmatprep.subr.bf16.mxu0 0
    %1116 = vmatpush1.bf16.msra.mxu0 %v1087
    %1117 = vmatprep.subr.bf16.mxu0 0
    %1118 = vmatpush1.bf16.msra.mxu0 %v1088
    %1119 = vmatprep.subr.bf16.mxu0 0
    %1120 = vmatpush1.bf16.msra.mxu0 %v1089
    %1121 = vmatprep.subr.bf16.mxu0 0
    %1122 = vmatpush1.bf16.msra.mxu0 %v1090
    %1123 = vmatprep.subr.bf16.mxu0 0
    %1124 = vmatpush1.bf16.msra.mxu0 %v1091
    %1125 = vmatprep.subr.bf16.mxu0 0
    %1126 = vmatpush1.bf16.msra.mxu0 %v1092
    %1127 = vmatprep.subr.bf16.mxu0 0
    %1128 = vmatpush1.bf16.msra.mxu0 %v1093
    %1129 = vmatprep.subr.bf16.mxu0 0
    %1130 = vmatpush1.bf16.msra.mxu0 %v1094
    %1131 = vmatprep.subr.bf16.mxu0 0
    %1132 = vmatpush1.bf16.msra.mxu0 %v1095
    %1133 = vmatprep.subr.bf16.mxu0 0
    %1134 = vmatpush1.bf16.msra.mxu0 %v1096
    %1135 = vmatprep.subr.bf16.mxu0 0
    %1136 = vmatpush1.bf16.msra.mxu0 %v1097
    %1137 = vmatprep.mubr.bf16.mxu0 %v241
    %1138 = vmatmul.mubr.bf16.gmra.mrb[0].mxu0 %v240
    %v1139 = vpop.f32.mrb[0].mxu0
    %v1140 = vadd.f32 %v1103, %v1139
    %v1141 = vpop.f32.mrb[0].mxu0
    %v1142 = vpop.f32.mrb[0].mxu0
    %v1143 = vadd.f32 %v1103, %v1142
    %v1144 = vpop.f32.mrb[0].mxu0
    %1145 = vmatprep.mubr.bf16.mxu0 %v243
    %1146 = vmatmul.mubr.bf16.gmra.mrb[0].mxu0 %v242
    %v1147 = vpop.f32.mrb[0].mxu0
    %v1148 = vadd.f32 %v1103, %v1147
    %v1149 = vpop.f32.mrb[0].mxu0
    %v1150 = vpop.f32.mrb[0].mxu0
    %v1151 = vadd.f32 %v1103, %v1150
    %v1152 = vpop.f32.mrb[0].mxu0
    %1153 = vmatprep.mubr.bf16.mxu0 %v245
    %1154 = vmatmul.mubr.bf16.gmra.mrb[0].mxu0 %v244
    %v1155 = vpop.f32.mrb[0].mxu0
    %v1156 = vadd.f32 %v1103, %v1155
    %v1157 = vpop.f32.mrb[0].mxu0
    %v1158 = vpop.f32.mrb[0].mxu0
    %v1159 = vadd.f32 %v1103, %v1158
    %v1160 = vpop.f32.mrb[0].mxu0
    %1161 = vmatprep.mubr.bf16.mxu0 %v247
    %1162 = vmatmul.mubr.bf16.gmra.mrb[0].mxu0 %v246
    %v1163 = vpop.f32.mrb[0].mxu0
    %v1164 = vadd.f32 %v1103, %v1163
    %v1165 = vpop.f32.mrb[0].mxu0
    %v1166 = vpop.f32.mrb[0].mxu0
    %v1167 = vadd.f32 %v1103, %v1166
    %v1168 = vpop.f32.mrb[0].mxu0
    %1169 = vmatprep.mubr.bf16.mxu0 %v249
    %1170 = vmatmul.mubr.bf16.gmra.mrb[0].mxu0 %v248
    %v1171 = vpop.f32.mrb[0].mxu0
    %v1172 = vadd.f32 %v1103, %v1171
    %v1173 = vpop.f32.mrb[0].mxu0
    %v1174 = vpop.f32.mrb[0].mxu0
    %v1175 = vadd.f32 %v1103, %v1174
    %v1176 = vpop.f32.mrb[0].mxu0
    %1177 = vmatprep.mubr.bf16.mxu0 %v251
    %1178 = vmatmul.mubr.bf16.gmra.mrb[0].mxu0 %v250
    %v1179 = vpop.f32.mrb[0].mxu0
    %v1180 = vadd.f32 %v1103, %v1179
    %v1181 = vpop.f32.mrb[0].mxu0
    %v1182 = vpop.f32.mrb[0].mxu0
    %v1183 = vadd.f32 %v1103, %v1182
    %v1184 = vpop.f32.mrb[0].mxu0
    %1185 = vmatprep.mubr.bf16.mxu0 %v253
    %1186 = vmatmul.mubr.bf16.gmra.mrb[0].mxu0 %v252
    %v1187 = vpop.f32.mrb[0].mxu0
    %v1188 = vadd.f32 %v1103, %v1187
    %v1189 = vpop.f32.mrb[0].mxu0
    %v1190 = vpop.f32.mrb[0].mxu0
    %v1191 = vadd.f32 %v1103, %v1190
    %v1192 = vpop.f32.mrb[0].mxu0
    %1193 = vmatprep.mubr.bf16.mxu0 %v255
    %1194 = vmatmul.mubr.bf16.gmra.mrb[0].mxu0 %v254
    %v1195 = vpop.f32.mrb[0].mxu0
    %v1196 = vadd.f32 %v1103, %v1195
    %v1197 = vpop.f32.mrb[0].mxu0
    %v1198 = vpop.f32.mrb[0].mxu0
    %v1199 = vadd.f32 %v1103, %v1198
    %v1200 = vpop.f32.mrb[0].mxu0
    %1201 = vmatprep.mubr.bf16.mxu0 %v257
    %1202 = vmatmul.mubr.bf16.gmra.mrb[0].mxu0 %v256
    %v1203 = vpop.f32.mrb[0].mxu0
    %v1204 = vadd.f32 %v1103, %v1203
    %v1205 = vpop.f32.mrb[0].mxu0
    %v1206 = vpop.f32.mrb[0].mxu0
    %v1207 = vadd.f32 %v1103, %v1206
    %v1208 = vpop.f32.mrb[0].mxu0
    %1209 = vmatprep.mubr.bf16.mxu0 %v259
    %1210 = vmatmul.mubr.bf16.gmra.mrb[0].mxu0 %v258
    %v1211 = vpop.f32.mrb[0].mxu0
    %v1212 = vadd.f32 %v1103, %v1211
    %v1213 = vpop.f32.mrb[0].mxu0
    %v1214 = vpop.f32.mrb[0].mxu0
    %v1215 = vadd.f32 %v1103, %v1214
    %v1216 = vpop.f32.mrb[0].mxu0
    %1217 = vmatprep.mubr.bf16.mxu0 %v261
    %1218 = vmatmul.mubr.bf16.gmra.mrb[0].mxu0 %v260
    %v1219 = vpop.f32.mrb[0].mxu0
    %v1220 = vadd.f32 %v1103, %v1219
    %v1221 = vpop.f32.mrb[0].mxu0
    %v1222 = vpop.f32.mrb[0].mxu0
    %v1223 = vadd.f32 %v1103, %v1222
    %v1224 = vpop.f32.mrb[0].mxu0
    %1225 = vmatprep.mubr.bf16.mxu0 %v263
    %1226 = vmatmul.mubr.bf16.gmra.mrb[0].mxu0 %v262
    %v1227 = vpop.f32.mrb[0].mxu0
    %v1228 = vadd.f32 %v1103, %v1227
    %v1229 = vpop.f32.mrb[0].mxu0
    %v1230 = vpop.f32.mrb[0].mxu0
    %v1231 = vadd.f32 %v1103, %v1230
    %v1232 = vpop.f32.mrb[0].mxu0
    %1233 = vmatprep.mubr.bf16.mxu0 %v265
    %1234 = vmatmul.mubr.bf16.gmra.mrb[0].mxu0 %v264
    %v1235 = vpop.f32.mrb[0].mxu0
    %v1236 = vadd.f32 %v1103, %v1235
    %v1237 = vpop.f32.mrb[0].mxu0
    %v1238 = vpop.f32.mrb[0].mxu0
    %v1239 = vadd.f32 %v1103, %v1238
    %v1240 = vpop.f32.mrb[0].mxu0
    %1241 = vmatprep.mubr.bf16.mxu0 %v267
    %1242 = vmatmul.mubr.bf16.gmra.mrb[0].mxu0 %v266
    %v1243 = vpop.f32.mrb[0].mxu0
    %v1244 = vadd.f32 %v1103, %v1243
    %v1245 = vpop.f32.mrb[0].mxu0
    %v1246 = vpop.f32.mrb[0].mxu0
    %v1247 = vadd.f32 %v1103, %v1246
    %v1248 = vpop.f32.mrb[0].mxu0
    %1249 = vmatprep.mubr.bf16.mxu0 %v269
    %1250 = vmatmul.mubr.bf16.gmra.mrb[0].mxu0 %v268
    %v1251 = vpop.f32.mrb[0].mxu0
    %v1252 = vadd.f32 %v1103, %v1251
    %v1253 = vpop.f32.mrb[0].mxu0
    %v1254 = vpop.f32.mrb[0].mxu0
    %v1255 = vadd.f32 %v1103, %v1254
    %v1256 = vpop.f32.mrb[0].mxu0
    %1257 = vmatprep.mubr.bf16.mxu0 %v271
    %1258 = vmatmul.mubr.bf16.gmra.mrb[0].mxu0 %v270
    %v1259 = vpop.f32.mrb[0].mxu0
    %v1260 = vadd.f32 %v1103, %v1259
    %v1261 = vpop.f32.mrb[0].mxu0
    %v1262 = vpop.f32.mrb[0].mxu0
    %v1263 = vadd.f32 %v1103, %v1262
    %v1264 = vpop.f32.mrb[0].mxu0
    %1265 = vdwg.mxu0
    %1266 = vst [vmem:[#allocation10] sm:$0xff] %v1140
    %1267 = vst [vmem:[#allocation10 + $0x8] sm:$0xff] %v1143
    %1268 = vst [vmem:[#allocation10 + $0x10] sm:$0xff] %v1148
    %1269 = vst [vmem:[#allocation10 + $0x18] sm:$0xff] %v1151
    %1270 = vst [vmem:[#allocation10 + $0x20] sm:$0xff] %v1156
    %1271 = vst [vmem:[#allocation10 + $0x28] sm:$0xff] %v1159
    %1272 = vst [vmem:[#allocation10 + $0x30] sm:$0xff] %v1164
    %1273 = vst [vmem:[#allocation10 + $0x38] sm:$0xff] %v1167
    %1274 = vst [vmem:[#allocation10 + $0x40] sm:$0xff] %v1172
    %1275 = vst [vmem:[#allocation10 + $0x48] sm:$0xff] %v1175
    %1276 = vst [vmem:[#allocation10 + $0x50] sm:$0xff] %v1180
    %1277 = vst [vmem:[#allocation10 + $0x58] sm:$0xff] %v1183
    %1278 = vst [vmem:[#allocation10 + $0x60] sm:$0xff] %v1188
    %1279 = vst [vmem:[#allocation10 + $0x68] sm:$0xff] %v1191
    %1280 = vst [vmem:[#allocation10 + $0x70] sm:$0xff] %v1196
    %1281 = vst [vmem:[#allocation10 + $0x78] sm:$0xff] %v1199
    %1282 = vst [vmem:[#allocation10 + $0x80] sm:$0xff] %v1204
    %1283 = vst [vmem:[#allocation10 + $0x88] sm:$0xff] %v1207
    %1284 = vst [vmem:[#allocation10 + $0x90] sm:$0xff] %v1212
    %1285 = vst [vmem:[#allocation10 + $0x98] sm:$0xff] %v1215
    %1286 = vst [vmem:[#allocation10 + $0xa0] sm:$0xff] %v1220
    %1287 = vst [vmem:[#allocation10 + $0xa8] sm:$0xff] %v1223
    %1288 = vst [vmem:[#allocation10 + $0xb0] sm:$0xff] %v1228
    %1289 = vst [vmem:[#allocation10 + $0xb8] sm:$0xff] %v1231
    %1290 = vst [vmem:[#allocation10 + $0xc0] sm:$0xff] %v1236
    %1291 = vst [vmem:[#allocation10 + $0xc8] sm:$0xff] %v1239
    %1292 = vst [vmem:[#allocation10 + $0xd0] sm:$0xff] %v1244
    %1293 = vst [vmem:[#allocation10 + $0xd8] sm:$0xff] %v1247
    %1294 = vst [vmem:[#allocation10 + $0xe0] sm:$0xff] %v1252
    %1295 = vst [vmem:[#allocation10 + $0xe8] sm:$0xff] %v1255
    %1296 = vst [vmem:[#allocation10 + $0xf0] sm:$0xff] %v1260
    %1297 = vst [vmem:[#allocation10 + $0xf8] sm:$0xff] %v1263
    // Predicated region
    $region42: #{tpu_custom_call.1} parent=1 // pred_check
      _
    $region43: #{tpu_custom_call.1} parent=1 // pred_check_branch
      %1299 = sbr.rel (0) target = $region45
    $region44: #{tpu_custom_call.1} parent=1 // pred_region
      %s1301 = ssub.s32 4096, 4096
      %1302 = vsyncadd [#allocation4], %s1301
      %s1303 = sshll.u32 [#allocation10], 4
      %s1304 = int_to_ptr.vmem [resolvable:$true] %s1303
      %1309 = dma.vmem_to_hbm [thread:$0]  %s1304, 4096, %s6, [#allocation4], 128, 128, 8
    $region45: #{tpu_custom_call.1} parent=1 // pred_fallthru
      _
    // Predicated region
    $region46: #{tpu_custom_call.1} parent=1 // pred_check
      _
    $region47: #{tpu_custom_call.1} parent=1 // pred_check_branch
      %1311 = sbr.rel (0) target = $region49
    $region48: #{tpu_custom_call.1} parent=1 // pred_region
      %1312 = dma.done [#allocation4], 4096
    $region49: #{tpu_custom_call.1} parent=1 // pred_fallthru
      _
    %1313 = vsyncpa [#allocation3], 1
    %1314 = vsyncpa [#allocation6], 1
    %1315 = vsyncpa [#allocation9], 1
    %1316 = vsyncpa [#allocation4], 1

</llo_original>
